<compile_context>
chip_gen: v6e
topology: v6e:2x2x1
jax: 0.10.0
libtpu: 0.0.40
codegen_flags: <defaults>
</compile_context>

<pallas_src>
import functools

import jax
import jax.numpy as jnp
from jax.experimental import pallas as pl
from jax.experimental.pallas import tpu as pltpu

H1 = 400  # l1 output width (fixed by the module)
H2 = 300  # l2 output width (fixed by the module)


def _round_up(a: int, m: int) -> int:
    return ((a + m - 1) // m) * m


def _critic_kernel(x_ref, u_ref, w1_ref, b1_ref, w2x_ref, w2u_ref, b2_ref,
                   w3_ref, o_ref):
    # ---- Layer 1: (TB, S) @ (S, 400) on the MXU, f32 accumulation; bias+ReLU on VPU.
    h1 = jnp.dot(x_ref[...], w1_ref[...], preferred_element_type=jnp.float32)
    h1 = jnp.maximum(h1 + b1_ref[...], 0.0)

    # ---- Layer 2: cat([h1, u], 1) @ W2 == h1 @ W2_x + u @ W2_u (no concat needed).
    # h1 is cast to the MXU input dtype (bf16 when enabled); bias/ReLU stay f32.
    h2 = jnp.dot(h1.astype(w2x_ref.dtype), w2x_ref[...],
                 preferred_element_type=jnp.float32)
    h2 = h2 + jnp.dot(u_ref[...], w2u_ref[...], preferred_element_type=jnp.float32)
    h2 = jnp.maximum(h2 + b2_ref[...], 0.0)

    # ---- Layer 3 (N=1): VPU multiply against the (1, 300) w3 row + lane reduction
    # (keepdims keeps the result 2-D). Keeps the MXU free; b3 added in the wrapper.
    q = jnp.sum(h2 * w3_ref[...], axis=-1, keepdims=True)   # (TB, 1) f32
    o_ref[...] = q.astype(o_ref.dtype)


@functools.partial(jax.jit, static_argnames=("block_b", "mxu_dtype"))
def compute_q_hat(x, u, params, *, block_b=512, mxu_dtype=jnp.float32):
    """Fused Pallas forward of the DDPG Critic.

    x: (B, state_dim) f32, u: (B, action_dim) f32 -> (B, 1) f32.
    params: w1 (S,400), b1 (1,400), w2x (400,300), w2u (A,300), b2 (1,300),
            w3 (300,1), b3 (1,1)  (weights stored as (in_features, out_features)).
    """
    B, S = x.shape
    A = u.shape[1]

    # Batch tiling: big tiles for large batches, single 8-row-aligned tile otherwise.
    if B <= block_b:
        block_b_eff = _round_up(B, 8)
    else:
        block_b_eff = _round_up(block_b, 128)
    B_pad = _round_up(B, block_b_eff)
    num_tiles = B_pad // block_b_eff

    if B_pad != B:
        x = jnp.pad(x, ((0, B_pad - B), (0, 0)))
        u = jnp.pad(u, ((0, B_pad - B), (0, 0)))

    # MXU inputs optionally bf16 (v6e/v7x bf16-native); biases & accumulation stay f32.
    xc = x.astype(mxu_dtype)
    uc = u.astype(mxu_dtype)
    w1 = params["w1"].astype(mxu_dtype)
    w2x = params["w2x"].astype(mxu_dtype)
    w2u = params["w2u"].astype(mxu_dtype)
    b1 = params["b1"].astype(jnp.float32)
    b2 = params["b2"].astype(jnp.float32)
    w3_row = params["w3"].reshape(1, H2).astype(jnp.float32)  # (1, 300) row for reduce

    def rep(shape):
        # Weights: same block every grid step -> DMA'd once, stay resident in VMEM.
        return pl.BlockSpec(shape, lambda i: (0, 0))

    out = pl.pallas_call(
        _critic_kernel,
        out_shape=jax.ShapeDtypeStruct((B_pad, 1), jnp.float32),
        grid_spec=pltpu.PrefetchScalarGridSpec(
            num_scalar_prefetch=0,
            grid=(num_tiles,),
            in_specs=[
                pl.BlockSpec((block_b_eff, S), lambda i: (i, 0)),  # x tile
                pl.BlockSpec((block_b_eff, A), lambda i: (i, 0)),  # u tile
                rep((S, H1)),    # w1
                rep((1, H1)),    # b1
                rep((H1, H2)),   # w2 (h1 part)
                rep((A, H2)),    # w2 (u part)
                rep((1, H2)),    # b2
                rep((1, H2)),    # w3 as a row
            ],
            out_specs=pl.BlockSpec((block_b_eff, 1), lambda i: (i, 0)),
        ),
        compiler_params=pltpu.CompilerParams(
            dimension_semantics=("parallel",)),  # batch tiles independent
    )(xc, uc, w1, b1, w2x, w2u, b2, w3_row)

    # Strip padding and add the scalar l3 bias outside the kernel.
    return out[:B] + params["b3"].astype(jnp.float32)


def init_params(key, state_dim, action_dim):
    """Mimics torch.nn.Linear default init U(-1/sqrt(fan_in), +1/sqrt(fan_in)).

    Weights stored transposed relative to PyTorch: (in_features, out_features).
    """
    ks = jax.random.split(key, 6)

    def lin(kw, kb, fan_in, fan_out):
        bound = 1.0 / jnp.sqrt(jnp.float32(fan_in))
        w = jax.random.uniform(kw, (fan_in, fan_out), jnp.float32, -bound, bound)
        b = jax.random.uniform(kb, (1, fan_out), jnp.float32, -bound, bound)
        return w, b

    w1, b1 = lin(ks[0], ks[1], state_dim, H1)
    w2, b2 = lin(ks[2], ks[3], H1 + action_dim, H2)
    w3, b3 = lin(ks[4], ks[5], H2, 1)
    return {
        "w1": w1, "b1": b1,
        "w2x": w2[:H1, :], "w2u": w2[H1:, :], "b2": b2,
        "w3": w3, "b3": b3,
    }


def reference_forward(x, u, p):
    """Pure-JAX reference matching the PyTorch forward (full-precision matmuls)."""
    with jax.default_matmul_precision("highest"):
        h1 = jax.nn.relu(x @ p["w1"] + p["b1"])
        cat = jnp.concatenate([h1, u], axis=1)
        w2 = jnp.concatenate([p["w2x"], p["w2u"]], axis=0)
        h2 = jax.nn.relu(cat @ w2 + p["b2"])
        return h2 @ p["w3"] + p["b3"]


if __name__ == "__main__":
    key = jax.random.PRNGKey(0)
    k_param, k_x, k_u = jax.random.split(key, 3)

    state_dim, action_dim = 32, 8
    params = init_params(k_param, state_dim, action_dim)

    # 1) Small single-tile case.
    x8 = jax.random.normal(k_x, (8, state_dim), jnp.float32)
    u8 = jax.random.normal(k_u, (8, action_dim), jnp.float32)
    q8 = jax.block_until_ready(compute_q_hat(x8, u8, params))
    q8_ref = reference_forward(x8, u8, params)
    assert q8.shape == (8, 1)
    assert jnp.allclose(q8, q8_ref, atol=5e-3, rtol=5e-3), (
        f"f32 small-batch mismatch: max abs err {jnp.max(jnp.abs(q8 - q8_ref))}")

    # 2) Multi-tile ragged batch (exercises padding + tiled grid).
    k2x, k2u = jax.random.split(jax.random.PRNGKey(1))
    xr = jax.random.normal(k2x, (300, state_dim), jnp.float32)
    ur = jax.random.normal(k2u, (300, action_dim), jnp.float32)
    qr = jax.block_until_ready(compute_q_hat(xr, ur, params, block_b=128))
    qr_ref = reference_forward(xr, ur, params)
    assert qr.shape == (300, 1)
    assert jnp.allclose(qr, qr_ref, atol=5e-3, rtol=5e-3), (
        f"f32 multi-tile mismatch: max abs err {jnp.max(jnp.abs(qr - qr_ref))}")

    # 3) bf16 MXU-input path (v6e/v7x); f32 accumulation keeps error small.
    qb = jax.block_until_ready(
        compute_q_hat(xr, ur, params, block_b=128, mxu_dtype=jnp.bfloat16))
    assert jnp.allclose(qb, qr_ref, atol=1e-1, rtol=1e-1), (
        f"bf16 mismatch: max abs err {jnp.max(jnp.abs(qb - qr_ref))}")

    print("KERNEL_OK")
</pallas_src>

<mosaic_0001>
module attributes {stable_mosaic.version = 11 : i64} {
  func.func @_critic_kernel(%arg0: i32, %arg1: memref<8x32xf32, #tpu.memory_space<vmem>>, %arg2: memref<8x8xf32, #tpu.memory_space<vmem>>, %arg3: memref<32x400xf32, #tpu.memory_space<vmem>>, %arg4: memref<1x400xf32, #tpu.memory_space<vmem>>, %arg5: memref<400x300xf32, #tpu.memory_space<vmem>>, %arg6: memref<8x300xf32, #tpu.memory_space<vmem>>, %arg7: memref<1x300xf32, #tpu.memory_space<vmem>>, %arg8: memref<1x300xf32, #tpu.memory_space<vmem>>, %arg9: memref<8x1xf32, #tpu.memory_space<vmem>>) attributes {dimension_semantics = [#tpu.dimension_semantics<parallel>], iteration_bounds = array<i64: 1>, scalar_prefetch = 0 : i64, scratch_operands = 0 : i64, tpu.core_type = #tpu.core_type<tc>, window_params = [{transform_indices = @transform_0, window_bounds = array<i64: 8, 32>}, {transform_indices = @transform_1, window_bounds = array<i64: 8, 8>}, {pipeline_mode = #tpu.pipeline_mode<synchronous>, transform_indices = @transform_2, window_bounds = array<i64: 32, 400>}, {pipeline_mode = #tpu.pipeline_mode<synchronous>, transform_indices = @transform_3, window_bounds = array<i64: 1, 400>}, {pipeline_mode = #tpu.pipeline_mode<synchronous>, transform_indices = @transform_4, window_bounds = array<i64: 400, 300>}, {pipeline_mode = #tpu.pipeline_mode<synchronous>, transform_indices = @transform_5, window_bounds = array<i64: 8, 300>}, {pipeline_mode = #tpu.pipeline_mode<synchronous>, transform_indices = @transform_6, window_bounds = array<i64: 1, 300>}, {pipeline_mode = #tpu.pipeline_mode<synchronous>, transform_indices = @transform_7, window_bounds = array<i64: 1, 300>}, {transform_indices = @transform_8, window_bounds = array<i64: 8, 1>}]} {
    %c0 = arith.constant 0 : index
    %c0_0 = arith.constant 0 : index
    %0 = vector.load %arg1[%c0, %c0_0] : memref<8x32xf32, #tpu.memory_space<vmem>>, vector<8x32xf32>
    %c0_1 = arith.constant 0 : index
    %c0_2 = arith.constant 0 : index
    %1 = vector.load %arg3[%c0_1, %c0_2] : memref<32x400xf32, #tpu.memory_space<vmem>>, vector<32x400xf32>
    %cst = arith.constant dense<0.000000e+00> : vector<8x400xf32>
    %2 = tpu.matmul %0, %1, %cst {dimension_numbers = #tpu.dot_dimension_numbers<[1], [0], [0], [1], [0, 0, 1, 1], [], []>} : vector<8x32xf32>, vector<32x400xf32>, vector<8x400xf32> -> vector<8x400xf32>
    %c0_3 = arith.constant 0 : index
    %c0_4 = arith.constant 0 : index
    %3 = vector.load %arg4[%c0_3, %c0_4] : memref<1x400xf32, #tpu.memory_space<vmem>>, vector<1x400xf32>
    %4 = vector.broadcast %3 : vector<1x400xf32> to vector<8x400xf32>
    %5 = arith.addf %2, %4 : vector<8x400xf32>
    %cst_5 = arith.constant 0.000000e+00 : f32
    %6 = vector.broadcast %cst_5 : f32 to vector<8x400xf32>
    %7 = arith.maximumf %5, %6 : vector<8x400xf32>
    %c0_6 = arith.constant 0 : index
    %c0_7 = arith.constant 0 : index
    %8 = vector.load %arg5[%c0_6, %c0_7] : memref<400x300xf32, #tpu.memory_space<vmem>>, vector<400x300xf32>
    %cst_8 = arith.constant dense<0.000000e+00> : vector<8x300xf32>
    %9 = tpu.matmul %7, %8, %cst_8 {dimension_numbers = #tpu.dot_dimension_numbers<[1], [0], [0], [1], [0, 0, 1, 1], [], []>} : vector<8x400xf32>, vector<400x300xf32>, vector<8x300xf32> -> vector<8x300xf32>
    %c0_9 = arith.constant 0 : index
    %c0_10 = arith.constant 0 : index
    %10 = vector.load %arg2[%c0_9, %c0_10] : memref<8x8xf32, #tpu.memory_space<vmem>>, vector<8x8xf32>
    %c0_11 = arith.constant 0 : index
    %c0_12 = arith.constant 0 : index
    %11 = vector.load %arg6[%c0_11, %c0_12] : memref<8x300xf32, #tpu.memory_space<vmem>>, vector<8x300xf32>
    %cst_13 = arith.constant dense<0.000000e+00> : vector<8x300xf32>
    %12 = tpu.matmul %10, %11, %cst_13 {dimension_numbers = #tpu.dot_dimension_numbers<[1], [0], [0], [1], [0, 0, 1, 1], [], []>} : vector<8x8xf32>, vector<8x300xf32>, vector<8x300xf32> -> vector<8x300xf32>
    %13 = arith.addf %9, %12 : vector<8x300xf32>
    %c0_14 = arith.constant 0 : index
    %c0_15 = arith.constant 0 : index
    %14 = vector.load %arg7[%c0_14, %c0_15] : memref<1x300xf32, #tpu.memory_space<vmem>>, vector<1x300xf32>
    %15 = vector.broadcast %14 : vector<1x300xf32> to vector<8x300xf32>
    %16 = arith.addf %13, %15 : vector<8x300xf32>
    %cst_16 = arith.constant 0.000000e+00 : f32
    %17 = vector.broadcast %cst_16 : f32 to vector<8x300xf32>
    %18 = arith.maximumf %16, %17 : vector<8x300xf32>
    %c0_17 = arith.constant 0 : index
    %c0_18 = arith.constant 0 : index
    %19 = vector.load %arg8[%c0_17, %c0_18] : memref<1x300xf32, #tpu.memory_space<vmem>>, vector<1x300xf32>
    %20 = vector.broadcast %19 : vector<1x300xf32> to vector<8x300xf32>
    %21 = arith.mulf %18, %20 : vector<8x300xf32>
    %cst_19 = arith.constant dense<0.000000e+00> : vector<8xf32>
    %22 = vector.multi_reduction <add>, %21, %cst_19 [1] : vector<8x300xf32> to vector<8xf32>
    %23 = vector.shape_cast %22 : vector<8xf32> to vector<8x1xf32>
    %c0_20 = arith.constant 0 : index
    %c0_21 = arith.constant 0 : index
    %24 = vector.load %arg9[%c0_20, %c0_21] : memref<8x1xf32, #tpu.memory_space<vmem>>, vector<8x1xf32>
    tpu.vector_store %arg9[%c0_20, %c0_21], %23 {strides = array<i32>} : memref<8x1xf32, #tpu.memory_space<vmem>>, vector<8x1xf32>,
    return
  }
  func.func @transform_0(%arg0: i32) -> (i32, i32) {
    %c0_i32 = arith.constant 0 : i32
    %c0_i32_0 = arith.constant 0 : i32
    return %arg0, %c0_i32 : i32, i32
  }
  func.func @transform_1(%arg0: i32) -> (i32, i32) {
    %c0_i32 = arith.constant 0 : i32
    %c0_i32_0 = arith.constant 0 : i32
    return %arg0, %c0_i32 : i32, i32
  }
  func.func @transform_2(%arg0: i32) -> (i32, i32) {
    %c0_i32 = arith.constant 0 : i32
    %c0_i32_0 = arith.constant 0 : i32
    %c0_i32_1 = arith.constant 0 : i32
    return %c0_i32, %c0_i32_0 : i32, i32
  }
  func.func @transform_3(%arg0: i32) -> (i32, i32) {
    %c0_i32 = arith.constant 0 : i32
    %c0_i32_0 = arith.constant 0 : i32
    %c0_i32_1 = arith.constant 0 : i32
    return %c0_i32, %c0_i32_0 : i32, i32
  }
  func.func @transform_4(%arg0: i32) -> (i32, i32) {
    %c0_i32 = arith.constant 0 : i32
    %c0_i32_0 = arith.constant 0 : i32
    %c0_i32_1 = arith.constant 0 : i32
    return %c0_i32, %c0_i32_0 : i32, i32
  }
  func.func @transform_5(%arg0: i32) -> (i32, i32) {
    %c0_i32 = arith.constant 0 : i32
    %c0_i32_0 = arith.constant 0 : i32
    %c0_i32_1 = arith.constant 0 : i32
    return %c0_i32, %c0_i32_0 : i32, i32
  }
  func.func @transform_6(%arg0: i32) -> (i32, i32) {
    %c0_i32 = arith.constant 0 : i32
    %c0_i32_0 = arith.constant 0 : i32
    %c0_i32_1 = arith.constant 0 : i32
    return %c0_i32, %c0_i32_0 : i32, i32
  }
  func.func @transform_7(%arg0: i32) -> (i32, i32) {
    %c0_i32 = arith.constant 0 : i32
    %c0_i32_0 = arith.constant 0 : i32
    %c0_i32_1 = arith.constant 0 : i32
    return %c0_i32, %c0_i32_0 : i32, i32
  }
  func.func @transform_8(%arg0: i32) -> (i32, i32) {
    %c0_i32 = arith.constant 0 : i32
    %c0_i32_0 = arith.constant 0 : i32
    return %arg0, %c0_i32 : i32, i32
  }
}

</mosaic_0001>

<llo_original>
// kernel: compute_q_hat.1
$region0: #{compute_q_hat.1}
  #allocation0 [shape = 'u32[]', space=smem, size = 0x4, offset = 0x4, fixed_abs, tag = 'smem constant byte address 0x4 - core index']
  #allocation1 [shape = 'u32[144,128]{1,0:T(1,128)}', space=vmem, size = 0x12000, scoped, tag = 'internal scratch']
  %s0 = inlined_call_operand.hbm [shape: f32[8,32], index: 0, kind: input, shape index: {}]
  %s1 = inlined_call_operand.hbm [shape: f32[8,8], index: 1, kind: input, shape index: {}]
  %s2 = inlined_call_operand.hbm [shape: f32[32,400], index: 2, kind: input, shape index: {}]
  %s3 = inlined_call_operand.vmem [shape: f32[1,400], index: 3, kind: input, shape index: {}]
  %s4 = inlined_call_operand.hbm [shape: f32[400,300], index: 4, kind: input, shape index: {}]
  %s5 = inlined_call_operand.hbm [shape: f32[8,300], index: 5, kind: input, shape index: {}]
  %s6 = inlined_call_operand.vmem [shape: f32[1,300], index: 6, kind: input, shape index: {}]
  %s7 = inlined_call_operand.vmem [shape: f32[1,300], index: 7, kind: input, shape index: {}]
  %s8 = inlined_call_operand.vmem [shape: f32[8,1], index: 8, kind: output, shape index: {}]
  %s9 = sld [smem:[#allocation0]]
  $region62: #{compute_q_hat.1} parent=0
    _
  %s11 = ssub.s32 1, %s9
  %s12 = scalar_select 0, %s11, %s9
  $region1: #{compute_q_hat.1} parent=0
    #allocation2 [shape = 'u8[4096]{0}', space=vmem, size = 0x1000, scoped, tag = 'input window, operand 0, single buffered']
    #allocation3 [shape = 's32[1]{0}', space=sflag, size = 0x4, scoped, tag = 'scoped memory for compute_q_hat.1']
    #allocation4 [shape = 'u8[4096]{0}', space=vmem, size = 0x1000, scoped, tag = 'input window, operand 1, single buffered']
    #allocation5 [shape = 's32[1]{0}', space=sflag, size = 0x4, scoped, tag = 'scoped memory for compute_q_hat.1']
    #allocation6 [shape = 'u8[65536]{0}', space=vmem, size = 0x10000, scoped, tag = 'input window, operand 2, single buffered']
    #allocation7 [shape = 'u8[614400]{0}', space=vmem, size = 0x96000, scoped, tag = 'input window, operand 4, single buffered']
    #allocation8 [shape = 's32[1]{0}', space=sflag, size = 0x4, scoped, tag = 'scoped memory for compute_q_hat.1']
    #allocation9 [shape = 'u8[12288]{0}', space=vmem, size = 0x3000, scoped, tag = 'input window, operand 5, single buffered']
    %13 = vsyncpa [#allocation3], 0
    %14 = vsyncpa [#allocation5], 0
    %15 = vsyncpa [#allocation8], 0
    // Predicated region
    $region2: #{compute_q_hat.1} parent=1 // pred_check
      _
    $region3: #{compute_q_hat.1} parent=1 // pred_check_branch
      %17 = sbr.rel (0) target = $region5
    $region4: #{compute_q_hat.1} parent=1 // pred_region
      %s19 = ssub.s32 128, 128
      %20 = vsyncadd [#allocation3], %s19
      %s22 = sshll.u32 [#allocation2], 4
      %s23 = int_to_ptr.vmem [resolvable:$true] %s22
      %25 = dma.hbm_to_vmem [thread:$0]  %s0, 128, %s23, [#allocation3]
    $region5: #{compute_q_hat.1} parent=1 // pred_fallthru
      _
    // Predicated region
    $region6: #{compute_q_hat.1} parent=1 // pred_check
      _
    $region7: #{compute_q_hat.1} parent=1 // pred_check_branch
      %27 = sbr.rel (0) target = $region9
    $region8: #{compute_q_hat.1} parent=1 // pred_region
      %s29 = ssub.s32 128, 128
      %30 = vsyncadd [#allocation5], %s29
      %s32 = sshll.u32 [#allocation4], 4
      %s33 = int_to_ptr.vmem [resolvable:$true] %s32
      %35 = dma.hbm_to_vmem [thread:$0]  %s1, 128, %s33, [#allocation5]
    $region9: #{compute_q_hat.1} parent=1 // pred_fallthru
      _
    // Predicated region
    $region10: #{compute_q_hat.1} parent=1 // pred_check
      _
    $region11: #{compute_q_hat.1} parent=1 // pred_check_branch
      %37 = sbr.rel (0) target = $region13
    $region12: #{compute_q_hat.1} parent=1 // pred_region
      %s39 = ssub.s32 2048, 2048
      %40 = vsyncadd [#allocation5], %s39
      %s41 = sshll.u32 [#allocation6], 4
      %s42 = int_to_ptr.vmem [resolvable:$true] %s41
      %47 = dma.hbm_to_vmem [thread:$0]  %s2, 2048, %s42, [#allocation5], 512, 512, 32
    $region13: #{compute_q_hat.1} parent=1 // pred_fallthru
      _
    // Predicated region
    $region14: #{compute_q_hat.1} parent=1 // pred_check
      _
    $region15: #{compute_q_hat.1} parent=1 // pred_check_branch
      %49 = sbr.rel (0) target = $region17
    $region16: #{compute_q_hat.1} parent=1 // pred_region
      _
    $region17: #{compute_q_hat.1} parent=1 // pred_fallthru
      _
    // Predicated region
    $region18: #{compute_q_hat.1} parent=1 // pred_check
      _
    $region19: #{compute_q_hat.1} parent=1 // pred_check_branch
      %51 = sbr.rel (0) target = $region21
    $region20: #{compute_q_hat.1} parent=1 // pred_region
      %s53 = ssub.s32 19200, 19200
      %54 = vsyncadd [#allocation8], %s53
      %s55 = sshll.u32 [#allocation7], 4
      %s56 = int_to_ptr.vmem [resolvable:$true] %s55
      %61 = dma.hbm_to_vmem [thread:$0]  %s4, 19200, %s56, [#allocation8], 384, 384, 24
    $region21: #{compute_q_hat.1} parent=1 // pred_fallthru
      _
    // Predicated region
    $region22: #{compute_q_hat.1} parent=1 // pred_check
      _
    $region23: #{compute_q_hat.1} parent=1 // pred_check_branch
      %63 = sbr.rel (0) target = $region25
    $region24: #{compute_q_hat.1} parent=1 // pred_region
      %s65 = ssub.s32 384, 384
      %66 = vsyncadd [#allocation8], %s65
      %s68 = sshll.u32 [#allocation9], 4
      %s69 = int_to_ptr.vmem [resolvable:$true] %s68
      %71 = dma.hbm_to_vmem [thread:$0]  %s5, 384, %s69, [#allocation8]
    $region25: #{compute_q_hat.1} parent=1 // pred_fallthru
      _
    // Predicated region
    $region26: #{compute_q_hat.1} parent=1 // pred_check
      _
    $region27: #{compute_q_hat.1} parent=1 // pred_check_branch
      %73 = sbr.rel (0) target = $region29
    $region28: #{compute_q_hat.1} parent=1 // pred_region
      _
    $region29: #{compute_q_hat.1} parent=1 // pred_fallthru
      _
    // Predicated region
    $region30: #{compute_q_hat.1} parent=1 // pred_check
      _
    $region31: #{compute_q_hat.1} parent=1 // pred_check_branch
      %75 = sbr.rel (0) target = $region33
    $region32: #{compute_q_hat.1} parent=1 // pred_region
      _
    $region33: #{compute_q_hat.1} parent=1 // pred_fallthru
      _
    // Predicated region
    $region34: #{compute_q_hat.1} parent=1 // pred_check
      _
    $region35: #{compute_q_hat.1} parent=1 // pred_check_branch
      %77 = sbr.rel (0) target = $region37
    $region36: #{compute_q_hat.1} parent=1 // pred_region
      %78 = dma.done [#allocation3], 128
    $region37: #{compute_q_hat.1} parent=1 // pred_fallthru
      _
    // Predicated region
    $region38: #{compute_q_hat.1} parent=1 // pred_check
      _
    $region39: #{compute_q_hat.1} parent=1 // pred_check_branch
      %80 = sbr.rel (0) target = $region41
    $region40: #{compute_q_hat.1} parent=1 // pred_region
      %81 = dma.done [#allocation5], 128
    $region41: #{compute_q_hat.1} parent=1 // pred_fallthru
      _
    // Predicated region
    $region42: #{compute_q_hat.1} parent=1 // pred_check
      _
    $region43: #{compute_q_hat.1} parent=1 // pred_check_branch
      %83 = sbr.rel (0) target = $region45
    $region44: #{compute_q_hat.1} parent=1 // pred_region
      %84 = dma.done [#allocation5], 2048
    $region45: #{compute_q_hat.1} parent=1 // pred_fallthru
      _
    // Predicated region
    $region46: #{compute_q_hat.1} parent=1 // pred_check
      _
    $region47: #{compute_q_hat.1} parent=1 // pred_check_branch
      %86 = sbr.rel (0) target = $region49
    $region48: #{compute_q_hat.1} parent=1 // pred_region
      %87 = dma.done [#allocation8], 19200
    $region49: #{compute_q_hat.1} parent=1 // pred_fallthru
      _
    // Predicated region
    $region50: #{compute_q_hat.1} parent=1 // pred_check
      _
    $region51: #{compute_q_hat.1} parent=1 // pred_check_branch
      %89 = sbr.rel (0) target = $region53
    $region52: #{compute_q_hat.1} parent=1 // pred_region
      %90 = dma.done [#allocation8], 384
    $region53: #{compute_q_hat.1} parent=1 // pred_fallthru
      _
    %v91 = vld [vmem:[#allocation2] sm:$0xff]
    %v92 = vld [vmem:[#allocation6] sm:$0xff]
    %v93 = vld [vmem:[#allocation6 + $0x8] sm:$0xff]
    %v94 = vld [vmem:[#allocation6 + $0x10] sm:$0xff]
    %v95 = vld [vmem:[#allocation6 + $0x18] sm:$0xff]
    %v96 = vld [vmem:[#allocation6 + $0x20] sm:$0xff]
    %v97 = vld [vmem:[#allocation6 + $0x28] sm:$0xff]
    %v98 = vld [vmem:[#allocation6 + $0x30] sm:$0xff]
    %v99 = vld [vmem:[#allocation6 + $0x38] sm:$0xff]
    %v100 = vld [vmem:[#allocation6 + $0x40] sm:$0xff]
    %v101 = vld [vmem:[#allocation6 + $0x48] sm:$0xff]
    %v102 = vld [vmem:[#allocation6 + $0x50] sm:$0xff]
    %v103 = vld [vmem:[#allocation6 + $0x58] sm:$0xff]
    %v104 = vld [vmem:[#allocation6 + $0x60] sm:$0xff]
    %v105 = vld [vmem:[#allocation6 + $0x68] sm:$0xff]
    %v106 = vld [vmem:[#allocation6 + $0x70] sm:$0xff]
    %v107 = vld [vmem:[#allocation6 + $0x78] sm:$0xff]
    %v108 = vld [vmem:[%s3] sm:$0xf]
    %v110 = vlaneseq
    %v111 = vshrl.u32 %v110, 7
    %v112 = vsub.s32 0, %v111
    %v113 = vrot.slane %v108, %v112
    %v114 = vlaneseq
    %v115 = vshrl.u32 %v114, 7
    %v116 = vsub.s32 1, %v115
    %v117 = vrot.slane %v108, %v116
    %v118 = vlaneseq
    %v119 = vshrl.u32 %v118, 7
    %v120 = vsub.s32 2, %v119
    %v121 = vrot.slane %v108, %v120
    %v122 = vlaneseq
    %v123 = vshrl.u32 %v122, 7
    %v124 = vsub.s32 3, %v123
    %v125 = vrot.slane %v108, %v124
    %vm130 = vcmask 261120
    %v132 = vsel %vm130, %v91, 0
    %134 = vmatprep.subr.mxu0 0.0
    %135 = vmatpush1.msra.mxu0 0.0
    %136 = vmatprep.subr.mxu0 0.0
    %137 = vmatpush1.msra.mxu0 0.0
    %138 = vmatprep.subr.mxu0 0.0
    %139 = vmatpush1.msra.mxu0 0.0
    %140 = vmatprep.subr.mxu0 0.0
    %141 = vmatpush1.msra.mxu0 0.0
    %142 = vmatprep.subr.mxu0 0.0
    %143 = vmatpush1.msra.mxu0 0.0
    %144 = vmatprep.subr.mxu0 0.0
    %145 = vmatpush1.msra.mxu0 0.0
    %146 = vmatprep.subr.mxu0 0.0
    %147 = vmatpush1.msra.mxu0 0.0
    %148 = vmatprep.subr.mxu0 0.0
    %149 = vmatpush1.msra.mxu0 0.0
    %150 = vmatprep.subr.mxu0 0.0
    %151 = vmatpush1.msra.mxu0 0.0
    %152 = vmatprep.subr.mxu0 0.0
    %153 = vmatpush1.msra.mxu0 0.0
    %154 = vmatprep.subr.mxu0 0.0
    %155 = vmatpush1.msra.mxu0 0.0
    %156 = vmatprep.subr.mxu0 0.0
    %157 = vmatpush1.msra.mxu0 0.0
    %158 = vmatprep.subr.mxu0 %v105
    %159 = vmatpush1.msra.mxu0 %v104
    %160 = vmatprep.subr.mxu0 %v101
    %161 = vmatpush1.msra.mxu0 %v100
    %162 = vmatprep.subr.mxu0 %v97
    %163 = vmatpush1.msra.mxu0 %v96
    %164 = vmatprep.subr.mxu0 %v93
    %165 = vmatpush1.msra.mxu0 %v92
    %166 = vmatprep.subr.mxu0 0.0
    %167 = vmatpush2.msra.mxu0 0.0
    %168 = vmatprep.subr.mxu0 0.0
    %169 = vmatpush2.msra.mxu0 0.0
    %170 = vmatprep.subr.mxu0 0.0
    %171 = vmatpush2.msra.mxu0 0.0
    %172 = vmatprep.subr.mxu0 0.0
    %173 = vmatpush2.msra.mxu0 0.0
    %174 = vmatprep.subr.mxu0 0.0
    %175 = vmatpush2.msra.mxu0 0.0
    %176 = vmatprep.subr.mxu0 0.0
    %177 = vmatpush2.msra.mxu0 0.0
    %178 = vmatprep.subr.mxu0 0.0
    %179 = vmatpush2.msra.mxu0 0.0
    %180 = vmatprep.subr.mxu0 0.0
    %181 = vmatpush2.msra.mxu0 0.0
    %182 = vmatprep.subr.mxu0 0.0
    %183 = vmatpush2.msra.mxu0 0.0
    %184 = vmatprep.subr.mxu0 0.0
    %185 = vmatpush2.msra.mxu0 0.0
    %186 = vmatprep.subr.mxu0 0.0
    %187 = vmatpush2.msra.mxu0 0.0
    %188 = vmatprep.subr.mxu0 0.0
    %189 = vmatpush2.msra.mxu0 0.0
    %190 = vmatprep.subr.mxu0 0.0
    %191 = vmatpush2.msra.mxu0 0.0
    %192 = vmatprep.subr.mxu0 0.0
    %193 = vmatpush2.msra.mxu0 0.0
    %194 = vmatprep.subr.mxu0 0.0
    %195 = vmatpush2.msra.mxu0 0.0
    %196 = vmatprep.subr.mxu0 0.0
    %197 = vmatpush2.msra.mxu0 0.0
    %198 = vmatprep.mubr.f32.mxu0 0.0
    %199 = vmatmul.mubr.f32.gmra.mxu0 %v132
    %v200 = vpop.f32.mrf.mxu0
    %v201 = vadd.f32 %v113, %v200
    %v202 = vpop.f32.mrf.mxu0
    %v203 = vadd.f32 %v117, %v202
    %204 = vdwg.mxu0
    %205 = vmatprep.subr.mxu0 0.0
    %206 = vmatpush1.msra.mxu0 0.0
    %207 = vmatprep.subr.mxu0 0.0
    %208 = vmatpush1.msra.mxu0 0.0
    %209 = vmatprep.subr.mxu0 0.0
    %210 = vmatpush1.msra.mxu0 0.0
    %211 = vmatprep.subr.mxu0 0.0
    %212 = vmatpush1.msra.mxu0 0.0
    %213 = vmatprep.subr.mxu0 0.0
    %214 = vmatpush1.msra.mxu0 0.0
    %215 = vmatprep.subr.mxu0 0.0
    %216 = vmatpush1.msra.mxu0 0.0
    %217 = vmatprep.subr.mxu0 0.0
    %218 = vmatpush1.msra.mxu0 0.0
    %219 = vmatprep.subr.mxu0 0.0
    %220 = vmatpush1.msra.mxu0 0.0
    %221 = vmatprep.subr.mxu0 0.0
    %222 = vmatpush1.msra.mxu0 0.0
    %223 = vmatprep.subr.mxu0 0.0
    %224 = vmatpush1.msra.mxu0 0.0
    %225 = vmatprep.subr.mxu0 0.0
    %226 = vmatpush1.msra.mxu0 0.0
    %227 = vmatprep.subr.mxu0 0.0
    %228 = vmatpush1.msra.mxu0 0.0
    %229 = vmatprep.subr.mxu0 %v107
    %230 = vmatpush1.msra.mxu0 %v106
    %231 = vmatprep.subr.mxu0 %v103
    %232 = vmatpush1.msra.mxu0 %v102
    %233 = vmatprep.subr.mxu0 %v99
    %234 = vmatpush1.msra.mxu0 %v98
    %235 = vmatprep.subr.mxu0 %v95
    %236 = vmatpush1.msra.mxu0 %v94
    %237 = vmatprep.subr.mxu0 0.0
    %238 = vmatpush2.msra.mxu0 0.0
    %239 = vmatprep.subr.mxu0 0.0
    %240 = vmatpush2.msra.mxu0 0.0
    %241 = vmatprep.subr.mxu0 0.0
    %242 = vmatpush2.msra.mxu0 0.0
    %243 = vmatprep.subr.mxu0 0.0
    %244 = vmatpush2.msra.mxu0 0.0
    %245 = vmatprep.subr.mxu0 0.0
    %246 = vmatpush2.msra.mxu0 0.0
    %247 = vmatprep.subr.mxu0 0.0
    %248 = vmatpush2.msra.mxu0 0.0
    %249 = vmatprep.subr.mxu0 0.0
    %250 = vmatpush2.msra.mxu0 0.0
    %251 = vmatprep.subr.mxu0 0.0
    %252 = vmatpush2.msra.mxu0 0.0
    %253 = vmatprep.subr.mxu0 0.0
    %254 = vmatpush2.msra.mxu0 0.0
    %255 = vmatprep.subr.mxu0 0.0
    %256 = vmatpush2.msra.mxu0 0.0
    %257 = vmatprep.subr.mxu0 0.0
    %258 = vmatpush2.msra.mxu0 0.0
    %259 = vmatprep.subr.mxu0 0.0
    %260 = vmatpush2.msra.mxu0 0.0
    %261 = vmatprep.subr.mxu0 0.0
    %262 = vmatpush2.msra.mxu0 0.0
    %263 = vmatprep.subr.mxu0 0.0
    %264 = vmatpush2.msra.mxu0 0.0
    %265 = vmatprep.subr.mxu0 0.0
    %266 = vmatpush2.msra.mxu0 0.0
    %267 = vmatprep.subr.mxu0 0.0
    %268 = vmatpush2.msra.mxu0 0.0
    %269 = vmatprep.mubr.f32.mxu0 0.0
    %270 = vmatmul.mubr.f32.gmra.mxu0 %v132
    %v271 = vpop.f32.mrf.mxu0
    %v272 = vadd.f32 %v121, %v271
    %v273 = vpop.f32.mrf.mxu0
    %v274 = vadd.f32 %v125, %v273
    %275 = vdwg.mxu0
    %v276 = vmax.f32 %v201, 0.0
    %v277 = vmax.f32 %v203, 0.0
    %v278 = vmax.f32 %v272, 0.0
    %v279 = vmax.f32 %v274, 0.0
    %v280 = vld [vmem:[#allocation7] sm:$0xff]
    %v281 = vld [vmem:[#allocation7 + $0x8] sm:$0xff]
    %v282 = vld [vmem:[#allocation7 + $0x10] sm:$0xff]
    %v283 = vld [vmem:[#allocation7 + $0x18] sm:$0xff]
    %v284 = vld [vmem:[#allocation7 + $0x20] sm:$0xff]
    %v285 = vld [vmem:[#allocation7 + $0x28] sm:$0xff]
    %v286 = vld [vmem:[#allocation7 + $0x30] sm:$0xff]
    %v287 = vld [vmem:[#allocation7 + $0x38] sm:$0xff]
    %v288 = vld [vmem:[#allocation7 + $0x40] sm:$0xff]
    %v289 = vld [vmem:[#allocation7 + $0x48] sm:$0xff]
    %v290 = vld [vmem:[#allocation7 + $0x50] sm:$0xff]
    %v291 = vld [vmem:[#allocation7 + $0x58] sm:$0xff]
    %v292 = vld [vmem:[#allocation7 + $0x60] sm:$0xff]
    %v293 = vld [vmem:[#allocation7 + $0x68] sm:$0xff]
    %v294 = vld [vmem:[#allocation7 + $0x70] sm:$0xff]
    %v295 = vld [vmem:[#allocation7 + $0x78] sm:$0xff]
    %v296 = vld [vmem:[#allocation7 + $0x80] sm:$0xff]
    %v297 = vld [vmem:[#allocation7 + $0x88] sm:$0xff]
    %v298 = vld [vmem:[#allocation7 + $0x90] sm:$0xff]
    %v299 = vld [vmem:[#allocation7 + $0x98] sm:$0xff]
    %v300 = vld [vmem:[#allocation7 + $0xa0] sm:$0xff]
    %v301 = vld [vmem:[#allocation7 + $0xa8] sm:$0xff]
    %v302 = vld [vmem:[#allocation7 + $0xb0] sm:$0xff]
    %v303 = vld [vmem:[#allocation7 + $0xb8] sm:$0xff]
    %v304 = vld [vmem:[#allocation7 + $0xc0] sm:$0xff]
    %v305 = vld [vmem:[#allocation7 + $0xc8] sm:$0xff]
    %v306 = vld [vmem:[#allocation7 + $0xd0] sm:$0xff]
    %v307 = vld [vmem:[#allocation7 + $0xd8] sm:$0xff]
    %v308 = vld [vmem:[#allocation7 + $0xe0] sm:$0xff]
    %v309 = vld [vmem:[#allocation7 + $0xe8] sm:$0xff]
    %v310 = vld [vmem:[#allocation7 + $0xf0] sm:$0xff]
    %v311 = vld [vmem:[#allocation7 + $0xf8] sm:$0xff]
    %v312 = vld [vmem:[#allocation7 + $0x100] sm:$0xff]
    %v313 = vld [vmem:[#allocation7 + $0x108] sm:$0xff]
    %v314 = vld [vmem:[#allocation7 + $0x110] sm:$0xff]
    %v315 = vld [vmem:[#allocation7 + $0x118] sm:$0xff]
    %v316 = vld [vmem:[#allocation7 + $0x120] sm:$0xff]
    %v317 = vld [vmem:[#allocation7 + $0x128] sm:$0xff]
    %v318 = vld [vmem:[#allocation7 + $0x130] sm:$0xff]
    %v319 = vld [vmem:[#allocation7 + $0x138] sm:$0xff]
    %v320 = vld [vmem:[#allocation7 + $0x140] sm:$0xff]
    %v321 = vld [vmem:[#allocation7 + $0x148] sm:$0xff]
    %v322 = vld [vmem:[#allocation7 + $0x150] sm:$0xff]
    %v323 = vld [vmem:[#allocation7 + $0x158] sm:$0xff]
    %v324 = vld [vmem:[#allocation7 + $0x160] sm:$0xff]
    %v325 = vld [vmem:[#allocation7 + $0x168] sm:$0xff]
    %v326 = vld [vmem:[#allocation7 + $0x170] sm:$0xff]
    %v327 = vld [vmem:[#allocation7 + $0x178] sm:$0xff]
    %v328 = vld [vmem:[#allocation7 + $0x180] sm:$0xff]
    %v329 = vld [vmem:[#allocation7 + $0x188] sm:$0xff]
    %v330 = vld [vmem:[#allocation7 + $0x190] sm:$0xff]
    %v331 = vld [vmem:[#allocation7 + $0x198] sm:$0xff]
    %v332 = vld [vmem:[#allocation7 + $0x1a0] sm:$0xff]
    %v333 = vld [vmem:[#allocation7 + $0x1a8] sm:$0xff]
    %v334 = vld [vmem:[#allocation7 + $0x1b0] sm:$0xff]
    %v335 = vld [vmem:[#allocation7 + $0x1b8] sm:$0xff]
    %v336 = vld [vmem:[#allocation7 + $0x1c0] sm:$0xff]
    %v337 = vld [vmem:[#allocation7 + $0x1c8] sm:$0xff]
    %v338 = vld [vmem:[#allocation7 + $0x1d0] sm:$0xff]
    %v339 = vld [vmem:[#allocation7 + $0x1d8] sm:$0xff]
    %v340 = vld [vmem:[#allocation7 + $0x1e0] sm:$0xff]
    %v341 = vld [vmem:[#allocation7 + $0x1e8] sm:$0xff]
    %v342 = vld [vmem:[#allocation7 + $0x1f0] sm:$0xff]
    %v343 = vld [vmem:[#allocation7 + $0x1f8] sm:$0xff]
    %v344 = vld [vmem:[#allocation7 + $0x200] sm:$0xff]
    %v345 = vld [vmem:[#allocation7 + $0x208] sm:$0xff]
    %v346 = vld [vmem:[#allocation7 + $0x210] sm:$0xff]
    %v347 = vld [vmem:[#allocation7 + $0x218] sm:$0xff]
    %v348 = vld [vmem:[#allocation7 + $0x220] sm:$0xff]
    %v349 = vld [vmem:[#allocation7 + $0x228] sm:$0xff]
    %v350 = vld [vmem:[#allocation7 + $0x230] sm:$0xff]
    %v351 = vld [vmem:[#allocation7 + $0x238] sm:$0xff]
    %v352 = vld [vmem:[#allocation7 + $0x240] sm:$0xff]
    %v353 = vld [vmem:[#allocation7 + $0x248] sm:$0xff]
    %v354 = vld [vmem:[#allocation7 + $0x250] sm:$0xff]
    %v355 = vld [vmem:[#allocation7 + $0x258] sm:$0xff]
    %v356 = vld [vmem:[#allocation7 + $0x260] sm:$0xff]
    %v357 = vld [vmem:[#allocation7 + $0x268] sm:$0xff]
    %v358 = vld [vmem:[#allocation7 + $0x270] sm:$0xff]
    %v359 = vld [vmem:[#allocation7 + $0x278] sm:$0xff]
    %v360 = vld [vmem:[#allocation7 + $0x280] sm:$0xff]
    %v361 = vld [vmem:[#allocation7 + $0x288] sm:$0xff]
    %v362 = vld [vmem:[#allocation7 + $0x290] sm:$0xff]
    %v363 = vld [vmem:[#allocation7 + $0x298] sm:$0xff]
    %v364 = vld [vmem:[#allocation7 + $0x2a0] sm:$0xff]
    %v365 = vld [vmem:[#allocation7 + $0x2a8] sm:$0xff]
    %v366 = vld [vmem:[#allocation7 + $0x2b0] sm:$0xff]
    %v367 = vld [vmem:[#allocation7 + $0x2b8] sm:$0xff]
    %v368 = vld [vmem:[#allocation7 + $0x2c0] sm:$0xff]
    %v369 = vld [vmem:[#allocation7 + $0x2c8] sm:$0xff]
    %v370 = vld [vmem:[#allocation7 + $0x2d0] sm:$0xff]
    %v371 = vld [vmem:[#allocation7 + $0x2d8] sm:$0xff]
    %v372 = vld [vmem:[#allocation7 + $0x2e0] sm:$0xff]
    %v373 = vld [vmem:[#allocation7 + $0x2e8] sm:$0xff]
    %v374 = vld [vmem:[#allocation7 + $0x2f0] sm:$0xff]
    %v375 = vld [vmem:[#allocation7 + $0x2f8] sm:$0xff]
    %v376 = vld [vmem:[#allocation7 + $0x300] sm:$0xff]
    %v377 = vld [vmem:[#allocation7 + $0x308] sm:$0xff]
    %v378 = vld [vmem:[#allocation7 + $0x310] sm:$0xff]
    %v379 = vld [vmem:[#allocation7 + $0x318] sm:$0xff]
    %v380 = vld [vmem:[#allocation7 + $0x320] sm:$0xff]
    %v381 = vld [vmem:[#allocation7 + $0x328] sm:$0xff]
    %v382 = vld [vmem:[#allocation7 + $0x330] sm:$0xff]
    %v383 = vld [vmem:[#allocation7 + $0x338] sm:$0xff]
    %v384 = vld [vmem:[#allocation7 + $0x340] sm:$0xff]
    %v385 = vld [vmem:[#allocation7 + $0x348] sm:$0xff]
    %v386 = vld [vmem:[#allocation7 + $0x350] sm:$0xff]
    %v387 = vld [vmem:[#allocation7 + $0x358] sm:$0xff]
    %v388 = vld [vmem:[#allocation7 + $0x360] sm:$0xff]
    %v389 = vld [vmem:[#allocation7 + $0x368] sm:$0xff]
    %v390 = vld [vmem:[#allocation7 + $0x370] sm:$0xff]
    %v391 = vld [vmem:[#allocation7 + $0x378] sm:$0xff]
    %v392 = vld [vmem:[#allocation7 + $0x380] sm:$0xff]
    %v393 = vld [vmem:[#allocation7 + $0x388] sm:$0xff]
    %v394 = vld [vmem:[#allocation7 + $0x390] sm:$0xff]
    %v395 = vld [vmem:[#allocation7 + $0x398] sm:$0xff]
    %v396 = vld [vmem:[#allocation7 + $0x3a0] sm:$0xff]
    %v397 = vld [vmem:[#allocation7 + $0x3a8] sm:$0xff]
    %v398 = vld [vmem:[#allocation7 + $0x3b0] sm:$0xff]
    %v399 = vld [vmem:[#allocation7 + $0x3b8] sm:$0xff]
    %v400 = vld [vmem:[#allocation7 + $0x3c0] sm:$0xff]
    %v401 = vld [vmem:[#allocation7 + $0x3c8] sm:$0xff]
    %v402 = vld [vmem:[#allocation7 + $0x3d0] sm:$0xff]
    %v403 = vld [vmem:[#allocation7 + $0x3d8] sm:$0xff]
    %v404 = vld [vmem:[#allocation7 + $0x3e0] sm:$0xff]
    %v405 = vld [vmem:[#allocation7 + $0x3e8] sm:$0xff]
    %v406 = vld [vmem:[#allocation7 + $0x3f0] sm:$0xff]
    %v407 = vld [vmem:[#allocation7 + $0x3f8] sm:$0xff]
    %v408 = vld [vmem:[#allocation7 + $0x400] sm:$0xff]
    %v409 = vld [vmem:[#allocation7 + $0x408] sm:$0xff]
    %v410 = vld [vmem:[#allocation7 + $0x410] sm:$0xff]
    %v411 = vld [vmem:[#allocation7 + $0x418] sm:$0xff]
    %v412 = vld [vmem:[#allocation7 + $0x420] sm:$0xff]
    %v413 = vld [vmem:[#allocation7 + $0x428] sm:$0xff]
    %v414 = vld [vmem:[#allocation7 + $0x430] sm:$0xff]
    %v415 = vld [vmem:[#allocation7 + $0x438] sm:$0xff]
    %v416 = vld [vmem:[#allocation7 + $0x440] sm:$0xff]
    %v417 = vld [vmem:[#allocation7 + $0x448] sm:$0xff]
    %v418 = vld [vmem:[#allocation7 + $0x450] sm:$0xff]
    %v419 = vld [vmem:[#allocation7 + $0x458] sm:$0xff]
    %v420 = vld [vmem:[#allocation7 + $0x460] sm:$0xff]
    %v421 = vld [vmem:[#allocation7 + $0x468] sm:$0xff]
    %v422 = vld [vmem:[#allocation7 + $0x470] sm:$0xff]
    %v423 = vld [vmem:[#allocation7 + $0x478] sm:$0xff]
    %v424 = vld [vmem:[#allocation7 + $0x480] sm:$0xff]
    %v425 = vld [vmem:[#allocation7 + $0x488] sm:$0xff]
    %v426 = vld [vmem:[#allocation7 + $0x490] sm:$0xff]
    %v427 = vld [vmem:[#allocation7 + $0x498] sm:$0xff]
    %v428 = vld [vmem:[#allocation7 + $0x4a0] sm:$0xff]
    %v429 = vld [vmem:[#allocation7 + $0x4a8] sm:$0xff]
    %v430 = vld [vmem:[#allocation4] sm:$0xff]
    %v431 = vld [vmem:[#allocation9] sm:$0xff]
    %v432 = vld [vmem:[#allocation9 + $0x8] sm:$0xff]
    %v433 = vld [vmem:[#allocation9 + $0x10] sm:$0xff]
    %vm434 = vcmask 64512
    %v436 = vsel %vm434, %v430, 0
    %438 = vmatprep.subr.mxu0 0.0
    %439 = vmatpush1.msra.mxu0 0.0
    %440 = vmatprep.subr.mxu0 0.0
    %441 = vmatpush1.msra.mxu0 0.0
    %442 = vmatprep.subr.mxu0 0.0
    %443 = vmatpush1.msra.mxu0 0.0
    %444 = vmatprep.subr.mxu0 0.0
    %445 = vmatpush1.msra.mxu0 0.0
    %446 = vmatprep.subr.mxu0 0.0
    %447 = vmatpush1.msra.mxu0 0.0
    %448 = vmatprep.subr.mxu0 0.0
    %449 = vmatpush1.msra.mxu0 0.0
    %450 = vmatprep.subr.mxu0 0.0
    %451 = vmatpush1.msra.mxu0 0.0
    %452 = vmatprep.subr.mxu0 0.0
    %453 = vmatpush1.msra.mxu0 0.0
    %454 = vmatprep.subr.mxu0 0.0
    %455 = vmatpush1.msra.mxu0 0.0
    %456 = vmatprep.subr.mxu0 0.0
    %457 = vmatpush1.msra.mxu0 0.0
    %458 = vmatprep.subr.mxu0 0.0
    %459 = vmatpush1.msra.mxu0 0.0
    %460 = vmatprep.subr.mxu0 0.0
    %461 = vmatpush1.msra.mxu0 0.0
    %462 = vmatprep.subr.mxu0 0.0
    %463 = vmatpush1.msra.mxu0 0.0
    %464 = vmatprep.subr.mxu0 0.0
    %465 = vmatpush1.msra.mxu0 0.0
    %466 = vmatprep.subr.mxu0 0.0
    %467 = vmatpush1.msra.mxu0 0.0
    %468 = vmatprep.subr.mxu0 %v432
    %469 = vmatpush1.msra.mxu0 %v431
    %470 = vmatprep.subr.mxu0 0.0
    %471 = vmatpush2.msra.mxu0 0.0
    %472 = vmatprep.subr.mxu0 0.0
    %473 = vmatpush2.msra.mxu0 0.0
    %474 = vmatprep.subr.mxu0 0.0
    %475 = vmatpush2.msra.mxu0 0.0
    %476 = vmatprep.subr.mxu0 0.0
    %477 = vmatpush2.msra.mxu0 0.0
    %478 = vmatprep.subr.mxu0 0.0
    %479 = vmatpush2.msra.mxu0 0.0
    %480 = vmatprep.subr.mxu0 0.0
    %481 = vmatpush2.msra.mxu0 0.0
    %482 = vmatprep.subr.mxu0 0.0
    %483 = vmatpush2.msra.mxu0 0.0
    %484 = vmatprep.subr.mxu0 0.0
    %485 = vmatpush2.msra.mxu0 0.0
    %486 = vmatprep.subr.mxu0 0.0
    %487 = vmatpush2.msra.mxu0 0.0
    %488 = vmatprep.subr.mxu0 0.0
    %489 = vmatpush2.msra.mxu0 0.0
    %490 = vmatprep.subr.mxu0 0.0
    %491 = vmatpush2.msra.mxu0 0.0
    %492 = vmatprep.subr.mxu0 0.0
    %493 = vmatpush2.msra.mxu0 0.0
    %494 = vmatprep.subr.mxu0 0.0
    %495 = vmatpush2.msra.mxu0 0.0
    %496 = vmatprep.subr.mxu0 0.0
    %497 = vmatpush2.msra.mxu0 0.0
    %498 = vmatprep.subr.mxu0 0.0
    %499 = vmatpush2.msra.mxu0 0.0
    %500 = vmatprep.subr.mxu0 0.0
    %501 = vmatpush2.msra.mxu0 0.0
    %502 = vmatprep.mubr.f32.mxu0 0.0
    %503 = vmatmul.mubr.f32.gmra.mxu0 %v436
    %v504 = vpop.f32.mrf.mxu0
    %v505 = vadd.f32 0.0, %v504
    %v506 = vpop.f32.mrf.mxu0
    %v507 = vadd.f32 0.0, %v506
    %508 = vdwg.mxu0
    %509 = vmatprep.subr.mxu0 0.0
    %510 = vmatpush1.msra.mxu0 0.0
    %511 = vmatprep.subr.mxu0 0.0
    %512 = vmatpush1.msra.mxu0 0.0
    %513 = vmatprep.subr.mxu0 0.0
    %514 = vmatpush1.msra.mxu0 0.0
    %515 = vmatprep.subr.mxu0 0.0
    %516 = vmatpush1.msra.mxu0 0.0
    %517 = vmatprep.subr.mxu0 0.0
    %518 = vmatpush1.msra.mxu0 0.0
    %519 = vmatprep.subr.mxu0 0.0
    %520 = vmatpush1.msra.mxu0 0.0
    %521 = vmatprep.subr.mxu0 0.0
    %522 = vmatpush1.msra.mxu0 0.0
    %523 = vmatprep.subr.mxu0 0.0
    %524 = vmatpush1.msra.mxu0 0.0
    %525 = vmatprep.subr.mxu0 0.0
    %526 = vmatpush1.msra.mxu0 0.0
    %527 = vmatprep.subr.mxu0 0.0
    %528 = vmatpush1.msra.mxu0 0.0
    %529 = vmatprep.subr.mxu0 0.0
    %530 = vmatpush1.msra.mxu0 0.0
    %531 = vmatprep.subr.mxu0 0.0
    %532 = vmatpush1.msra.mxu0 0.0
    %533 = vmatprep.subr.mxu0 0.0
    %534 = vmatpush1.msra.mxu0 0.0
    %535 = vmatprep.subr.mxu0 0.0
    %536 = vmatpush1.msra.mxu0 0.0
    %537 = vmatprep.subr.mxu0 0.0
    %538 = vmatpush1.msra.mxu0 0.0
    %539 = vmatprep.subr.mxu0 0.0
    %540 = vmatpush1.msra.mxu0 %v433
    %541 = vmatprep.subr.mxu0 0.0
    %542 = vmatpush2.msra.mxu0 0.0
    %543 = vmatprep.subr.mxu0 0.0
    %544 = vmatpush2.msra.mxu0 0.0
    %545 = vmatprep.subr.mxu0 0.0
    %546 = vmatpush2.msra.mxu0 0.0
    %547 = vmatprep.subr.mxu0 0.0
    %548 = vmatpush2.msra.mxu0 0.0
    %549 = vmatprep.subr.mxu0 0.0
    %550 = vmatpush2.msra.mxu0 0.0
    %551 = vmatprep.subr.mxu0 0.0
    %552 = vmatpush2.msra.mxu0 0.0
    %553 = vmatprep.subr.mxu0 0.0
    %554 = vmatpush2.msra.mxu0 0.0
    %555 = vmatprep.subr.mxu0 0.0
    %556 = vmatpush2.msra.mxu0 0.0
    %557 = vmatprep.subr.mxu0 0.0
    %558 = vmatpush2.msra.mxu0 0.0
    %559 = vmatprep.subr.mxu0 0.0
    %560 = vmatpush2.msra.mxu0 0.0
    %561 = vmatprep.subr.mxu0 0.0
    %562 = vmatpush2.msra.mxu0 0.0
    %563 = vmatprep.subr.mxu0 0.0
    %564 = vmatpush2.msra.mxu0 0.0
    %565 = vmatprep.subr.mxu0 0.0
    %566 = vmatpush2.msra.mxu0 0.0
    %567 = vmatprep.subr.mxu0 0.0
    %568 = vmatpush2.msra.mxu0 0.0
    %569 = vmatprep.subr.mxu0 0.0
    %570 = vmatpush2.msra.mxu0 0.0
    %571 = vmatprep.subr.mxu0 0.0
    %572 = vmatpush2.msra.mxu0 0.0
    %573 = vmatprep.mubr.f32.mxu0 0.0
    %574 = vmatmul.mubr.f32.gmra.mxu0 %v436
    %v575 = vpop.f32.mrf.mxu0
    %v576 = vadd.f32 0.0, %v575
    %v577 = vpop.f32.mrf.mxu0
    %578 = vdwg.mxu0
    %vm579 = vcmask 130048
    %v581 = vsel %vm579, %v279, 0
    %583 = vmatprep.subr.mxu0 %v326
    %584 = vmatpush1.msra.mxu0 %v325
    %585 = vmatprep.subr.mxu0 %v323
    %586 = vmatpush1.msra.mxu0 %v322
    %587 = vmatprep.subr.mxu0 %v320
    %588 = vmatpush1.msra.mxu0 %v319
    %589 = vmatprep.subr.mxu0 %v317
    %590 = vmatpush1.msra.mxu0 %v316
    %591 = vmatprep.subr.mxu0 %v314
    %592 = vmatpush1.msra.mxu0 %v313
    %593 = vmatprep.subr.mxu0 %v311
    %594 = vmatpush1.msra.mxu0 %v310
    %595 = vmatprep.subr.mxu0 %v308
    %596 = vmatpush1.msra.mxu0 %v307
    %597 = vmatprep.subr.mxu0 %v305
    %598 = vmatpush1.msra.mxu0 %v304
    %599 = vmatprep.subr.mxu0 %v302
    %600 = vmatpush1.msra.mxu0 %v301
    %601 = vmatprep.subr.mxu0 %v299
    %602 = vmatpush1.msra.mxu0 %v298
    %603 = vmatprep.subr.mxu0 %v296
    %604 = vmatpush1.msra.mxu0 %v295
    %605 = vmatprep.subr.mxu0 %v293
    %606 = vmatpush1.msra.mxu0 %v292
    %607 = vmatprep.subr.mxu0 %v290
    %608 = vmatpush1.msra.mxu0 %v289
    %609 = vmatprep.subr.mxu0 %v287
    %610 = vmatpush1.msra.mxu0 %v286
    %611 = vmatprep.subr.mxu0 %v284
    %612 = vmatpush1.msra.mxu0 %v283
    %613 = vmatprep.subr.mxu0 %v281
    %614 = vmatpush1.msra.mxu0 %v280
    %615 = vmatprep.subr.mxu0 %v374
    %616 = vmatpush2.msra.mxu0 %v373
    %617 = vmatprep.subr.mxu0 %v371
    %618 = vmatpush2.msra.mxu0 %v370
    %619 = vmatprep.subr.mxu0 %v368
    %620 = vmatpush2.msra.mxu0 %v367
    %621 = vmatprep.subr.mxu0 %v365
    %622 = vmatpush2.msra.mxu0 %v364
    %623 = vmatprep.subr.mxu0 %v362
    %624 = vmatpush2.msra.mxu0 %v361
    %625 = vmatprep.subr.mxu0 %v359
    %626 = vmatpush2.msra.mxu0 %v358
    %627 = vmatprep.subr.mxu0 %v356
    %628 = vmatpush2.msra.mxu0 %v355
    %629 = vmatprep.subr.mxu0 %v353
    %630 = vmatpush2.msra.mxu0 %v352
    %631 = vmatprep.subr.mxu0 %v350
    %632 = vmatpush2.msra.mxu0 %v349
    %633 = vmatprep.subr.mxu0 %v347
    %634 = vmatpush2.msra.mxu0 %v346
    %635 = vmatprep.subr.mxu0 %v344
    %636 = vmatpush2.msra.mxu0 %v343
    %637 = vmatprep.subr.mxu0 %v341
    %638 = vmatpush2.msra.mxu0 %v340
    %639 = vmatprep.subr.mxu0 %v338
    %640 = vmatpush2.msra.mxu0 %v337
    %641 = vmatprep.subr.mxu0 %v335
    %642 = vmatpush2.msra.mxu0 %v334
    %643 = vmatprep.subr.mxu0 %v332
    %644 = vmatpush2.msra.mxu0 %v331
    %645 = vmatprep.subr.mxu0 %v329
    %646 = vmatpush2.msra.mxu0 %v328
    %647 = vmatprep.mubr.f32.mxu0 %v277
    %648 = vmatmul.mubr.f32.gmra.mxu0 %v276
    %v649 = vpop.f32.mrf.mxu0
    %v650 = vadd.f32 %v505, %v649
    %v651 = vpop.f32.mrf.mxu0
    %v652 = vadd.f32 %v507, %v651
    %653 = vdwg.mxu0
    %654 = vmatprep.subr.mxu0 %v422
    %655 = vmatpush1.msra.mxu0 %v421
    %656 = vmatprep.subr.mxu0 %v419
    %657 = vmatpush1.msra.mxu0 %v418
    %658 = vmatprep.subr.mxu0 %v416
    %659 = vmatpush1.msra.mxu0 %v415
    %660 = vmatprep.subr.mxu0 %v413
    %661 = vmatpush1.msra.mxu0 %v412
    %662 = vmatprep.subr.mxu0 %v410
    %663 = vmatpush1.msra.mxu0 %v409
    %664 = vmatprep.subr.mxu0 %v407
    %665 = vmatpush1.msra.mxu0 %v406
    %666 = vmatprep.subr.mxu0 %v404
    %667 = vmatpush1.msra.mxu0 %v403
    %668 = vmatprep.subr.mxu0 %v401
    %669 = vmatpush1.msra.mxu0 %v400
    %670 = vmatprep.subr.mxu0 %v398
    %671 = vmatpush1.msra.mxu0 %v397
    %672 = vmatprep.subr.mxu0 %v395
    %673 = vmatpush1.msra.mxu0 %v394
    %674 = vmatprep.subr.mxu0 %v392
    %675 = vmatpush1.msra.mxu0 %v391
    %676 = vmatprep.subr.mxu0 %v389
    %677 = vmatpush1.msra.mxu0 %v388
    %678 = vmatprep.subr.mxu0 %v386
    %679 = vmatpush1.msra.mxu0 %v385
    %680 = vmatprep.subr.mxu0 %v383
    %681 = vmatpush1.msra.mxu0 %v382
    %682 = vmatprep.subr.mxu0 %v380
    %683 = vmatpush1.msra.mxu0 %v379
    %684 = vmatprep.subr.mxu0 %v377
    %685 = vmatpush1.msra.mxu0 %v376
    %686 = vmatprep.subr.mxu0 0.0
    %687 = vmatpush2.msra.mxu0 0.0
    %688 = vmatprep.subr.mxu0 0.0
    %689 = vmatpush2.msra.mxu0 0.0
    %690 = vmatprep.subr.mxu0 0.0
    %691 = vmatpush2.msra.mxu0 0.0
    %692 = vmatprep.subr.mxu0 0.0
    %693 = vmatpush2.msra.mxu0 0.0
    %694 = vmatprep.subr.mxu0 0.0
    %695 = vmatpush2.msra.mxu0 0.0
    %696 = vmatprep.subr.mxu0 0.0
    %697 = vmatpush2.msra.mxu0 0.0
    %698 = vmatprep.subr.mxu0 0.0
    %699 = vmatpush2.msra.mxu0 0.0
    %700 = vmatprep.subr.mxu0 0.0
    %701 = vmatpush2.msra.mxu0 0.0
    %702 = vmatprep.subr.mxu0 0.0
    %703 = vmatpush2.msra.mxu0 0.0
    %704 = vmatprep.subr.mxu0 0.0
    %705 = vmatpush2.msra.mxu0 0.0
    %706 = vmatprep.subr.mxu0 0.0
    %707 = vmatpush2.msra.mxu0 0.0
    %708 = vmatprep.subr.mxu0 0.0
    %709 = vmatpush2.msra.mxu0 0.0
    %710 = vmatprep.subr.mxu0 0.0
    %711 = vmatpush2.msra.mxu0 0.0
    %712 = vmatprep.subr.mxu0 0.0
    %713 = vmatpush2.msra.mxu0 0.0
    %714 = vmatprep.subr.mxu0 %v428
    %715 = vmatpush2.msra.mxu0 %v427
    %716 = vmatprep.subr.mxu0 %v425
    %717 = vmatpush2.msra.mxu0 %v424
    %718 = vmatprep.mubr.f32.mxu0 %v581
    %719 = vmatmul.mubr.f32.gmra.mxu0 %v278
    %v720 = vpop.f32.mrf.mxu0
    %v721 = vadd.f32 %v650, %v720
    %v722 = vpop.f32.mrf.mxu0
    %v723 = vadd.f32 %v652, %v722
    %724 = vdwg.mxu0
    %725 = vmatprep.subr.mxu0 0.0
    %726 = vmatpush1.msra.mxu0 %v327
    %727 = vmatprep.subr.mxu0 0.0
    %728 = vmatpush1.msra.mxu0 %v324
    %729 = vmatprep.subr.mxu0 0.0
    %730 = vmatpush1.msra.mxu0 %v321
    %731 = vmatprep.subr.mxu0 0.0
    %732 = vmatpush1.msra.mxu0 %v318
    %733 = vmatprep.subr.mxu0 0.0
    %734 = vmatpush1.msra.mxu0 %v315
    %735 = vmatprep.subr.mxu0 0.0
    %736 = vmatpush1.msra.mxu0 %v312
    %737 = vmatprep.subr.mxu0 0.0
    %738 = vmatpush1.msra.mxu0 %v309
    %739 = vmatprep.subr.mxu0 0.0
    %740 = vmatpush1.msra.mxu0 %v306
    %741 = vmatprep.subr.mxu0 0.0
    %742 = vmatpush1.msra.mxu0 %v303
    %743 = vmatprep.subr.mxu0 0.0
    %744 = vmatpush1.msra.mxu0 %v300
    %745 = vmatprep.subr.mxu0 0.0
    %746 = vmatpush1.msra.mxu0 %v297
    %747 = vmatprep.subr.mxu0 0.0
    %748 = vmatpush1.msra.mxu0 %v294
    %749 = vmatprep.subr.mxu0 0.0
    %750 = vmatpush1.msra.mxu0 %v291
    %751 = vmatprep.subr.mxu0 0.0
    %752 = vmatpush1.msra.mxu0 %v288
    %753 = vmatprep.subr.mxu0 0.0
    %754 = vmatpush1.msra.mxu0 %v285
    %755 = vmatprep.subr.mxu0 0.0
    %756 = vmatpush1.msra.mxu0 %v282
    %757 = vmatprep.subr.mxu0 0.0
    %758 = vmatpush2.msra.mxu0 %v375
    %759 = vmatprep.subr.mxu0 0.0
    %760 = vmatpush2.msra.mxu0 %v372
    %761 = vmatprep.subr.mxu0 0.0
    %762 = vmatpush2.msra.mxu0 %v369
    %763 = vmatprep.subr.mxu0 0.0
    %764 = vmatpush2.msra.mxu0 %v366
    %765 = vmatprep.subr.mxu0 0.0
    %766 = vmatpush2.msra.mxu0 %v363
    %767 = vmatprep.subr.mxu0 0.0
    %768 = vmatpush2.msra.mxu0 %v360
    %769 = vmatprep.subr.mxu0 0.0
    %770 = vmatpush2.msra.mxu0 %v357
    %771 = vmatprep.subr.mxu0 0.0
    %772 = vmatpush2.msra.mxu0 %v354
    %773 = vmatprep.subr.mxu0 0.0
    %774 = vmatpush2.msra.mxu0 %v351
    %775 = vmatprep.subr.mxu0 0.0
    %776 = vmatpush2.msra.mxu0 %v348
    %777 = vmatprep.subr.mxu0 0.0
    %778 = vmatpush2.msra.mxu0 %v345
    %779 = vmatprep.subr.mxu0 0.0
    %780 = vmatpush2.msra.mxu0 %v342
    %781 = vmatprep.subr.mxu0 0.0
    %782 = vmatpush2.msra.mxu0 %v339
    %783 = vmatprep.subr.mxu0 0.0
    %784 = vmatpush2.msra.mxu0 %v336
    %785 = vmatprep.subr.mxu0 0.0
    %786 = vmatpush2.msra.mxu0 %v333
    %787 = vmatprep.subr.mxu0 0.0
    %788 = vmatpush2.msra.mxu0 %v330
    %789 = vmatprep.mubr.f32.mxu0 %v277
    %790 = vmatmul.mubr.f32.gmra.mxu0 %v276
    %v791 = vpop.f32.mrf.mxu0
    %v792 = vadd.f32 %v576, %v791
    %v793 = vpop.f32.mrf.mxu0
    %794 = vdwg.mxu0
    %795 = vmatprep.subr.mxu0 0.0
    %796 = vmatpush1.msra.mxu0 %v423
    %797 = vmatprep.subr.mxu0 0.0
    %798 = vmatpush1.msra.mxu0 %v420
    %799 = vmatprep.subr.mxu0 0.0
    %800 = vmatpush1.msra.mxu0 %v417
    %801 = vmatprep.subr.mxu0 0.0
    %802 = vmatpush1.msra.mxu0 %v414
    %803 = vmatprep.subr.mxu0 0.0
    %804 = vmatpush1.msra.mxu0 %v411
    %805 = vmatprep.subr.mxu0 0.0
    %806 = vmatpush1.msra.mxu0 %v408
    %807 = vmatprep.subr.mxu0 0.0
    %808 = vmatpush1.msra.mxu0 %v405
    %809 = vmatprep.subr.mxu0 0.0
    %810 = vmatpush1.msra.mxu0 %v402
    %811 = vmatprep.subr.mxu0 0.0
    %812 = vmatpush1.msra.mxu0 %v399
    %813 = vmatprep.subr.mxu0 0.0
    %814 = vmatpush1.msra.mxu0 %v396
    %815 = vmatprep.subr.mxu0 0.0
    %816 = vmatpush1.msra.mxu0 %v393
    %817 = vmatprep.subr.mxu0 0.0
    %818 = vmatpush1.msra.mxu0 %v390
    %819 = vmatprep.subr.mxu0 0.0
    %820 = vmatpush1.msra.mxu0 %v387
    %821 = vmatprep.subr.mxu0 0.0
    %822 = vmatpush1.msra.mxu0 %v384
    %823 = vmatprep.subr.mxu0 0.0
    %824 = vmatpush1.msra.mxu0 %v381
    %825 = vmatprep.subr.mxu0 0.0
    %826 = vmatpush1.msra.mxu0 %v378
    %827 = vmatprep.subr.mxu0 0.0
    %828 = vmatpush2.msra.mxu0 0.0
    %829 = vmatprep.subr.mxu0 0.0
    %830 = vmatpush2.msra.mxu0 0.0
    %831 = vmatprep.subr.mxu0 0.0
    %832 = vmatpush2.msra.mxu0 0.0
    %833 = vmatprep.subr.mxu0 0.0
    %834 = vmatpush2.msra.mxu0 0.0
    %835 = vmatprep.subr.mxu0 0.0
    %836 = vmatpush2.msra.mxu0 0.0
    %837 = vmatprep.subr.mxu0 0.0
    %838 = vmatpush2.msra.mxu0 0.0
    %839 = vmatprep.subr.mxu0 0.0
    %840 = vmatpush2.msra.mxu0 0.0
    %841 = vmatprep.subr.mxu0 0.0
    %842 = vmatpush2.msra.mxu0 0.0
    %843 = vmatprep.subr.mxu0 0.0
    %844 = vmatpush2.msra.mxu0 0.0
    %845 = vmatprep.subr.mxu0 0.0
    %846 = vmatpush2.msra.mxu0 0.0
    %847 = vmatprep.subr.mxu0 0.0
    %848 = vmatpush2.msra.mxu0 0.0
    %849 = vmatprep.subr.mxu0 0.0
    %850 = vmatpush2.msra.mxu0 0.0
    %851 = vmatprep.subr.mxu0 0.0
    %852 = vmatpush2.msra.mxu0 0.0
    %853 = vmatprep.subr.mxu0 0.0
    %854 = vmatpush2.msra.mxu0 0.0
    %855 = vmatprep.subr.mxu0 0.0
    %856 = vmatpush2.msra.mxu0 %v429
    %857 = vmatprep.subr.mxu0 0.0
    %858 = vmatpush2.msra.mxu0 %v426
    %859 = vmatprep.mubr.f32.mxu0 %v581
    %860 = vmatmul.mubr.f32.gmra.mxu0 %v278
    %v861 = vpop.f32.mrf.mxu0
    %v862 = vadd.f32 %v792, %v861
    %v863 = vpop.f32.mrf.mxu0
    %864 = vdwg.mxu0
    %v865 = vld [vmem:[%s6] sm:$0x7]
    %v867 = vlaneseq
    %v868 = vshrl.u32 %v867, 7
    %v869 = vsub.s32 0, %v868
    %v870 = vrot.slane %v865, %v869
    %v871 = vlaneseq
    %v872 = vshrl.u32 %v871, 7
    %v873 = vsub.s32 1, %v872
    %v874 = vrot.slane %v865, %v873
    %v875 = vlaneseq
    %v876 = vshrl.u32 %v875, 7
    %v877 = vsub.s32 2, %v876
    %v878 = vrot.slane %v865, %v877
    %v882 = vadd.f32 %v721, %v870
    %v883 = vadd.f32 %v723, %v874
    %v884 = vadd.f32 %v862, %v878
    %v885 = vmax.f32 %v882, 0.0
    %v886 = vmax.f32 %v883, 0.0
    %v887 = vmax.f32 %v884, 0.0
    %v888 = vld [vmem:[%s7] sm:$0x7]
    %v890 = vlaneseq
    %v891 = vshrl.u32 %v890, 7
    %v892 = vsub.s32 0, %v891
    %v893 = vrot.slane %v888, %v892
    %v894 = vlaneseq
    %v895 = vshrl.u32 %v894, 7
    %v896 = vsub.s32 1, %v895
    %v897 = vrot.slane %v888, %v896
    %v898 = vlaneseq
    %v899 = vshrl.u32 %v898, 7
    %v900 = vsub.s32 2, %v899
    %v901 = vrot.slane %v888, %v900
    %v905 = vmul.f32 %v885, %v893
    %v906 = vmul.f32 %v886, %v897
    %v907 = vmul.f32 %v887, %v901
    %v908 = vadd.f32 %v905, %v906
    %vm909 = vcmask 359424
    %v910 = vsel %vm909, %v907, 0.0
    %v911 = vadd.f32 %v908, %v910
    %912 = vadd.xlane.f32.xlu0 %v911
    %v913 = vpop.xlane.xlu0 %912
    %vm914 = vcmask 7168
    %915 = vst.msk [vmem:[%s8] sm:$0xff] %vm914, %v913
    // Predicated region
    $region54: #{compute_q_hat.1} parent=1 // pred_check
      _
    $region55: #{compute_q_hat.1} parent=1 // pred_check_branch
      %917 = sbr.rel (0) target = $region57
    $region56: #{compute_q_hat.1} parent=1 // pred_region
      _
    $region57: #{compute_q_hat.1} parent=1 // pred_fallthru
      _
    // Predicated region
    $region58: #{compute_q_hat.1} parent=1 // pred_check
      _
    $region59: #{compute_q_hat.1} parent=1 // pred_check_branch
      %919 = sbr.rel (0) target = $region61
    $region60: #{compute_q_hat.1} parent=1 // pred_region
      _
    $region61: #{compute_q_hat.1} parent=1 // pred_fallthru
      _
    %920 = vsyncpa [#allocation3], 1
    %921 = vsyncpa [#allocation5], 1
    %922 = vsyncpa [#allocation8], 1

</llo_original>
